<compile_context>
chip_gen: v7x
topology: tpu7x:2x2x1
jax: 0.10.0
libtpu: 0.0.40
codegen_flags: <defaults>
</compile_context>

<pallas_src>
import math
from functools import partial

import jax
import jax.numpy as jnp
from jax.experimental import pallas as pl
from jax.experimental.pallas import tpu as pltpu


KERNEL_SIZE = 15
SIGMA = 1.0


def _cdiv(a: int, b: int) -> int:
    return -(-a // b)


def _gaussian_taps(kernel_size: int, sigma: float):
    """Matches the torch __init__ exactly (deliberately NOT normalized to sum 1)."""
    mean = (kernel_size - 1) / 2.0
    coef = 1.0 / (sigma * math.sqrt(2.0 * math.pi))
    return tuple(
        float(coef * math.exp(-(((t - mean) / sigma) ** 2) / 2.0))
        for t in range(kernel_size)
    )


def _smooth_kernel(x_ref, o_ref, *, taps):
    """Depthwise reflect-padded 1D conv on a (row_block, L) tile.

    The reflect halo (<= 7 lanes per side) is materialised in registers from
    single-lane slices of the tile itself, so no padded copy of the input ever
    touches HBM.  out[:, j] = sum_k taps[k] * xp[:, j + k] with
    xp = [x[7], ..., x[1], x[0..L-1], x[L-2], ..., x[L-8]].
    """
    x = x_ref[...].astype(jnp.float32)          # (R, L)
    L = x.shape[-1]
    pad = len(taps) // 2                        # 7

    # Left halo lanes p=0..6 hold x[:, 7-p]; right halo lanes q=0..6 hold x[:, L-2-q].
    pieces = [x[:, pad - p : pad - p + 1] for p in range(pad)]
    pieces.append(x)
    pieces += [x[:, L - 2 - q : L - 1 - q] for q in range(pad)]
    xp = jnp.concatenate(pieces, axis=1)        # (R, L + 2*pad), reflect-padded

    # Accumulate directly (no 'pair' temp) — VPU has slack on this mem-bound op.
    acc = taps[pad] * xp[:, pad : pad + L]
    for s in range(1, pad + 1):
        acc = acc + taps[pad + s] * xp[:, pad + s : pad + s + L]
        acc = acc + taps[pad - s] * xp[:, pad - s : pad - s + L]

    o_ref[...] = acc.astype(o_ref.dtype)


def _choose_row_block(rows: int, L: int) -> int:
    """Row-block sizing: ~8 MiB of double-buffered f32 I/O, rounded to 8 rows,
    and an even grid-step count (balanced across the 2 TCs on v7x)."""
    io_budget = 8 << 20                             # bytes for 2x(in+out) buffers
    rb = min(1024, max(8, io_budget // (16 * max(L, 1))))
    rb = max(8, (rb // 8) * 8)
    if rows <= rb:
        return rows                                 # single full-extent block
    nsteps = _cdiv(rows, rb)
    if nsteps % 2:                                  # even step count for 2 TCs
        nsteps += 1
        rb = min(rb, max(8, 8 * _cdiv(_cdiv(rows, nsteps), 8)))
    return rb


@partial(jax.jit, static_argnames=("kernel_size", "sigma", "row_block"))
def gaussian_smoothing(inputs: jnp.ndarray,
                       kernel_size: int = KERNEL_SIZE,
                       sigma: float = SIGMA,
                       row_block: int | None = None) -> jnp.ndarray:
    """inputs: (B, C, L) -> filtered (B, C, L); same semantics as the torch module."""
    B, C, L = inputs.shape
    pad = (kernel_size - 1) // 2
    if L <= pad:
        raise ValueError(f"reflect padding requires L > {pad} (got L={L})")
    taps = _gaussian_taps(kernel_size, sigma)

    rows = B * C
    x2d = inputs.reshape(rows, L)                   # free (no copy)

    if row_block is None:
        row_block = _choose_row_block(rows, L)
    grid = (pl.cdiv(rows, row_block),)              # ragged last block is masked

    out2d = pl.pallas_call(
        partial(_smooth_kernel, taps=taps),
        out_shape=jax.ShapeDtypeStruct((rows, L), inputs.dtype),
        grid_spec=pltpu.PrefetchScalarGridSpec(
            num_scalar_prefetch=0,
            grid=grid,
            in_specs=[pl.BlockSpec((row_block, L), lambda i: (i, 0))],
            out_specs=pl.BlockSpec((row_block, L), lambda i: (i, 0)),
        ),
        compiler_params=pltpu.CompilerParams(
            dimension_semantics=("parallel",),
            vmem_limit_bytes=48 * 1024 * 1024,
        ),
    )(x2d)

    return out2d.reshape(B, C, L)


def _reference(inputs: jnp.ndarray, kernel_size: int, sigma: float) -> jnp.ndarray:
    """Pure-JAX reference of the torch forward (for the sanity check)."""
    pad = (kernel_size - 1) // 2
    taps = _gaussian_taps(kernel_size, sigma)
    xp = jnp.pad(inputs, ((0, 0), (0, 0), (pad, pad)), mode="reflect")
    xp = xp.astype(jnp.float32)
    L = inputs.shape[-1]
    out = jnp.zeros(inputs.shape, dtype=jnp.float32)
    for t in range(kernel_size):
        out = out + taps[t] * xp[:, :, t:t + L]
    return out.astype(inputs.dtype)


if __name__ == "__main__":
    # Primary small shape consistent with the module: (batch=2, channels=4, L=16).
    B, C, L = 2, 4, 16
    x = jax.random.normal(jax.random.PRNGKey(0), (B, C, L), dtype=jnp.float32)
    out = jax.block_until_ready(gaussian_smoothing(x))
    ref = _reference(x, KERNEL_SIZE, SIGMA)
    assert out.shape == (B, C, L)
    assert jnp.allclose(out, ref, atol=1e-5, rtol=1e-5)

    # Non-multiple-of-8 rows and non-multiple-of-128 length (single full-extent block).
    x2 = jax.random.normal(jax.random.PRNGKey(1), (3, 5, 200), dtype=jnp.float32)
    out2 = jax.block_until_ready(gaussian_smoothing(x2))
    assert out2.shape == (3, 5, 200)
    assert jnp.allclose(out2, _reference(x2, KERNEL_SIZE, SIGMA), atol=1e-5, rtol=1e-5)

    # Multi-step grid with a ragged (masked) final row block.
    x3 = jax.random.normal(jax.random.PRNGKey(2), (4, 10, 64), dtype=jnp.float32)
    out3 = jax.block_until_ready(gaussian_smoothing(x3, row_block=16))
    assert out3.shape == (4, 10, 64)
    assert jnp.allclose(out3, _reference(x3, KERNEL_SIZE, SIGMA), atol=1e-5, rtol=1e-5)

    print("KERNEL_OK")
</pallas_src>

<mosaic_0001>
module attributes {stable_mosaic.version = 11 : i64} {
  func.func @_smooth_kernel(%arg0: i32, %arg1: memref<8x16xf32, #tpu.memory_space<vmem>>, %arg2: memref<8x16xf32, #tpu.memory_space<vmem>>) attributes {dimension_semantics = [#tpu.dimension_semantics<parallel>], iteration_bounds = array<i64: 1>, scalar_prefetch = 0 : i64, scratch_operands = 0 : i64, tpu.core_type = #tpu.core_type<tc>, window_params = [{transform_indices = @transform_0, window_bounds = array<i64: 8, 16>}, {transform_indices = @transform_1, window_bounds = array<i64: 8, 16>}]} {
    %c0 = arith.constant 0 : index
    %c0_0 = arith.constant 0 : index
    %0 = vector.load %arg1[%c0, %c0_0] : memref<8x16xf32, #tpu.memory_space<vmem>>, vector<8x16xf32>
    %1 = vector.extract_strided_slice %0 {offsets = [0, 7], sizes = [8, 1], strides = [1, 1]} : vector<8x16xf32> to vector<8x1xf32>
    %2 = vector.extract_strided_slice %0 {offsets = [0, 6], sizes = [8, 1], strides = [1, 1]} : vector<8x16xf32> to vector<8x1xf32>
    %3 = vector.extract_strided_slice %0 {offsets = [0, 5], sizes = [8, 1], strides = [1, 1]} : vector<8x16xf32> to vector<8x1xf32>
    %4 = vector.extract_strided_slice %0 {offsets = [0, 4], sizes = [8, 1], strides = [1, 1]} : vector<8x16xf32> to vector<8x1xf32>
    %5 = vector.extract_strided_slice %0 {offsets = [0, 3], sizes = [8, 1], strides = [1, 1]} : vector<8x16xf32> to vector<8x1xf32>
    %6 = vector.extract_strided_slice %0 {offsets = [0, 2], sizes = [8, 1], strides = [1, 1]} : vector<8x16xf32> to vector<8x1xf32>
    %7 = vector.extract_strided_slice %0 {offsets = [0, 1], sizes = [8, 1], strides = [1, 1]} : vector<8x16xf32> to vector<8x1xf32>
    %8 = vector.extract_strided_slice %0 {offsets = [0, 14], sizes = [8, 1], strides = [1, 1]} : vector<8x16xf32> to vector<8x1xf32>
    %9 = vector.extract_strided_slice %0 {offsets = [0, 13], sizes = [8, 1], strides = [1, 1]} : vector<8x16xf32> to vector<8x1xf32>
    %10 = vector.extract_strided_slice %0 {offsets = [0, 12], sizes = [8, 1], strides = [1, 1]} : vector<8x16xf32> to vector<8x1xf32>
    %11 = vector.extract_strided_slice %0 {offsets = [0, 11], sizes = [8, 1], strides = [1, 1]} : vector<8x16xf32> to vector<8x1xf32>
    %12 = vector.extract_strided_slice %0 {offsets = [0, 10], sizes = [8, 1], strides = [1, 1]} : vector<8x16xf32> to vector<8x1xf32>
    %13 = vector.extract_strided_slice %0 {offsets = [0, 9], sizes = [8, 1], strides = [1, 1]} : vector<8x16xf32> to vector<8x1xf32>
    %14 = vector.extract_strided_slice %0 {offsets = [0, 8], sizes = [8, 1], strides = [1, 1]} : vector<8x16xf32> to vector<8x1xf32>
    %15 = tpu.concatenate %1, %2, %3, %4, %5, %6, %7, %0, %8, %9, %10, %11, %12, %13, %14 in 1 : vector<8x1xf32>, vector<8x1xf32>, vector<8x1xf32>, vector<8x1xf32>, vector<8x1xf32>, vector<8x1xf32>, vector<8x1xf32>, vector<8x16xf32>, vector<8x1xf32>, vector<8x1xf32>, vector<8x1xf32>, vector<8x1xf32>, vector<8x1xf32>, vector<8x1xf32>, vector<8x1xf32> -> vector<8x30xf32>
    %16 = vector.extract_strided_slice %15 {offsets = [0, 7], sizes = [8, 16], strides = [1, 1]} : vector<8x30xf32> to vector<8x16xf32>
    %cst = arith.constant 0.398942292 : f32
    %17 = vector.broadcast %cst : f32 to vector<8x16xf32>
    %18 = arith.mulf %17, %16 : vector<8x16xf32>
    %19 = vector.extract_strided_slice %15 {offsets = [0, 8], sizes = [8, 16], strides = [1, 1]} : vector<8x30xf32> to vector<8x16xf32>
    %cst_1 = arith.constant 0.241970718 : f32
    %20 = vector.broadcast %cst_1 : f32 to vector<8x16xf32>
    %21 = arith.mulf %20, %19 : vector<8x16xf32>
    %22 = arith.addf %18, %21 : vector<8x16xf32>
    %23 = vector.extract_strided_slice %15 {offsets = [0, 6], sizes = [8, 16], strides = [1, 1]} : vector<8x30xf32> to vector<8x16xf32>
    %cst_2 = arith.constant 0.241970718 : f32
    %24 = vector.broadcast %cst_2 : f32 to vector<8x16xf32>
    %25 = arith.mulf %24, %23 : vector<8x16xf32>
    %26 = arith.addf %22, %25 : vector<8x16xf32>
    %27 = vector.extract_strided_slice %15 {offsets = [0, 9], sizes = [8, 16], strides = [1, 1]} : vector<8x30xf32> to vector<8x16xf32>
    %cst_3 = arith.constant 0.0539909676 : f32
    %28 = vector.broadcast %cst_3 : f32 to vector<8x16xf32>
    %29 = arith.mulf %28, %27 : vector<8x16xf32>
    %30 = arith.addf %26, %29 : vector<8x16xf32>
    %31 = vector.extract_strided_slice %15 {offsets = [0, 5], sizes = [8, 16], strides = [1, 1]} : vector<8x30xf32> to vector<8x16xf32>
    %cst_4 = arith.constant 0.0539909676 : f32
    %32 = vector.broadcast %cst_4 : f32 to vector<8x16xf32>
    %33 = arith.mulf %32, %31 : vector<8x16xf32>
    %34 = arith.addf %30, %33 : vector<8x16xf32>
    %35 = vector.extract_strided_slice %15 {offsets = [0, 10], sizes = [8, 16], strides = [1, 1]} : vector<8x30xf32> to vector<8x16xf32>
    %cst_5 = arith.constant 0.00443184841 : f32
    %36 = vector.broadcast %cst_5 : f32 to vector<8x16xf32>
    %37 = arith.mulf %36, %35 : vector<8x16xf32>
    %38 = arith.addf %34, %37 : vector<8x16xf32>
    %39 = vector.extract_strided_slice %15 {offsets = [0, 4], sizes = [8, 16], strides = [1, 1]} : vector<8x30xf32> to vector<8x16xf32>
    %cst_6 = arith.constant 0.00443184841 : f32
    %40 = vector.broadcast %cst_6 : f32 to vector<8x16xf32>
    %41 = arith.mulf %40, %39 : vector<8x16xf32>
    %42 = arith.addf %38, %41 : vector<8x16xf32>
    %43 = vector.extract_strided_slice %15 {offsets = [0, 11], sizes = [8, 16], strides = [1, 1]} : vector<8x30xf32> to vector<8x16xf32>
    %cst_7 = arith.constant 1.33830225E-4 : f32
    %44 = vector.broadcast %cst_7 : f32 to vector<8x16xf32>
    %45 = arith.mulf %44, %43 : vector<8x16xf32>
    %46 = arith.addf %42, %45 : vector<8x16xf32>
    %47 = vector.extract_strided_slice %15 {offsets = [0, 3], sizes = [8, 16], strides = [1, 1]} : vector<8x30xf32> to vector<8x16xf32>
    %cst_8 = arith.constant 1.33830225E-4 : f32
    %48 = vector.broadcast %cst_8 : f32 to vector<8x16xf32>
    %49 = arith.mulf %48, %47 : vector<8x16xf32>
    %50 = arith.addf %46, %49 : vector<8x16xf32>
    %51 = vector.extract_strided_slice %15 {offsets = [0, 12], sizes = [8, 16], strides = [1, 1]} : vector<8x30xf32> to vector<8x16xf32>
    %cst_9 = arith.constant 1.4867195E-6 : f32
    %52 = vector.broadcast %cst_9 : f32 to vector<8x16xf32>
    %53 = arith.mulf %52, %51 : vector<8x16xf32>
    %54 = arith.addf %50, %53 : vector<8x16xf32>
    %55 = vector.extract_strided_slice %15 {offsets = [0, 2], sizes = [8, 16], strides = [1, 1]} : vector<8x30xf32> to vector<8x16xf32>
    %cst_10 = arith.constant 1.4867195E-6 : f32
    %56 = vector.broadcast %cst_10 : f32 to vector<8x16xf32>
    %57 = arith.mulf %56, %55 : vector<8x16xf32>
    %58 = arith.addf %54, %57 : vector<8x16xf32>
    %59 = vector.extract_strided_slice %15 {offsets = [0, 13], sizes = [8, 16], strides = [1, 1]} : vector<8x30xf32> to vector<8x16xf32>
    %cst_11 = arith.constant 6.0758829E-9 : f32
    %60 = vector.broadcast %cst_11 : f32 to vector<8x16xf32>
    %61 = arith.mulf %60, %59 : vector<8x16xf32>
    %62 = arith.addf %58, %61 : vector<8x16xf32>
    %63 = vector.extract_strided_slice %15 {offsets = [0, 1], sizes = [8, 16], strides = [1, 1]} : vector<8x30xf32> to vector<8x16xf32>
    %cst_12 = arith.constant 6.0758829E-9 : f32
    %64 = vector.broadcast %cst_12 : f32 to vector<8x16xf32>
    %65 = arith.mulf %64, %63 : vector<8x16xf32>
    %66 = arith.addf %62, %65 : vector<8x16xf32>
    %67 = vector.extract_strided_slice %15 {offsets = [0, 14], sizes = [8, 16], strides = [1, 1]} : vector<8x30xf32> to vector<8x16xf32>
    %cst_13 = arith.constant 9.13472075E-12 : f32
    %68 = vector.broadcast %cst_13 : f32 to vector<8x16xf32>
    %69 = arith.mulf %68, %67 : vector<8x16xf32>
    %70 = arith.addf %66, %69 : vector<8x16xf32>
    %71 = vector.extract_strided_slice %15 {offsets = [0, 0], sizes = [8, 16], strides = [1, 1]} : vector<8x30xf32> to vector<8x16xf32>
    %cst_14 = arith.constant 9.13472075E-12 : f32
    %72 = vector.broadcast %cst_14 : f32 to vector<8x16xf32>
    %73 = arith.mulf %72, %71 : vector<8x16xf32>
    %74 = arith.addf %70, %73 : vector<8x16xf32>
    %c0_15 = arith.constant 0 : index
    %c0_16 = arith.constant 0 : index
    %75 = vector.load %arg2[%c0_15, %c0_16] : memref<8x16xf32, #tpu.memory_space<vmem>>, vector<8x16xf32>
    tpu.vector_store %arg2[%c0_15, %c0_16], %74 {strides = array<i32>} : memref<8x16xf32, #tpu.memory_space<vmem>>, vector<8x16xf32>,
    return
  }
  func.func @transform_0(%arg0: i32) -> (i32, i32) {
    %c0_i32 = arith.constant 0 : i32
    %c0_i32_0 = arith.constant 0 : i32
    return %arg0, %c0_i32 : i32, i32
  }
  func.func @transform_1(%arg0: i32) -> (i32, i32) {
    %c0_i32 = arith.constant 0 : i32
    %c0_i32_0 = arith.constant 0 : i32
    return %arg0, %c0_i32 : i32, i32
  }
}

</mosaic_0001>

<llo_original>
// kernel: gaussian_smoothing.1
$region0: #{gaussian_smoothing.1}
  #allocation0 [shape = 'u32[]', space=smem, size = 0x4, offset = 0x4, fixed_abs, tag = 'smem constant byte address 0x4 - core index']
  #allocation1 [shape = 'u32[144,128]{1,0:T(1,128)}', space=vmem, size = 0x12000, scoped, tag = 'internal scratch']
  %s0 = inlined_call_operand.hbm [shape: f32[8,16], index: 0, kind: input, shape index: {}]
  %s1 = inlined_call_operand.hbm [shape: f32[8,16], index: 1, kind: output, shape index: {}]
  %s2 = sld [smem:[#allocation0]]
  $region18: #{gaussian_smoothing.1} parent=0
    _
  %s4 = ssub.s32 1, %s2
  %s5 = scalar_select 0, %s4, %s2
  $region1: #{gaussian_smoothing.1} parent=0
    #allocation2 [shape = 'u8[4096]{0}', space=vmem, size = 0x1000, scoped, tag = 'input window, operand 0, single buffered']
    #allocation3 [shape = 's32[1]{0}', space=sflag, size = 0x4, scoped, tag = 'scoped memory for gaussian_smoothing.1']
    #allocation4 [shape = 's32[1]{0}', space=sflag, size = 0x4, scoped, tag = 'scoped memory for gaussian_smoothing.1']
    #allocation5 [shape = 'u8[4096]{0}', space=vmem, size = 0x1000, scoped, tag = 'output window, operand 0, single buffered']
    %6 = vsyncpa [#allocation3], 0
    %7 = vsyncpa [#allocation4], 0
    // Predicated region
    $region2: #{gaussian_smoothing.1} parent=1 // pred_check
      _
    $region3: #{gaussian_smoothing.1} parent=1 // pred_check_branch
      %9 = sbr.rel (0) target = $region5
    $region4: #{gaussian_smoothing.1} parent=1 // pred_region
      %s11 = ssub.s32 128, 128
      %12 = vsyncadd [#allocation3], %s11
      %s14 = sshll.u32 [#allocation2], 4
      %s15 = int_to_ptr.vmem [resolvable:$true] %s14
      %17 = dma.hbm_to_vmem [thread:$0]  %s0, 128, %s15, [#allocation3]
    $region5: #{gaussian_smoothing.1} parent=1 // pred_fallthru
      _
    // Predicated region
    $region6: #{gaussian_smoothing.1} parent=1 // pred_check
      _
    $region7: #{gaussian_smoothing.1} parent=1 // pred_check_branch
      %19 = sbr.rel (0) target = $region9
    $region8: #{gaussian_smoothing.1} parent=1 // pred_region
      %20 = dma.done [#allocation3], 128
    $region9: #{gaussian_smoothing.1} parent=1 // pred_fallthru
      _
    %v21 = vld [vmem:[#allocation2] sm:$0xff]
    %23 = vrot.lane.b32.xlu0 %v21, 121
    %v24 = vpop.permute.xlu0 %23
    %26 = vrot.lane.b32.xlu0 %v21, 123
    %v27 = vpop.permute.xlu0 %26
    %29 = vrot.lane.b32.xlu0 %v21, 125
    %v30 = vpop.permute.xlu0 %29
    %32 = vrot.lane.b32.xlu0 %v21, 127
    %v33 = vpop.permute.xlu0 %32
    %35 = vrot.lane.b32.xlu0 %v21, 1
    %v36 = vpop.permute.xlu0 %35
    %38 = vrot.lane.b32.xlu0 %v21, 3
    %v39 = vpop.permute.xlu0 %38
    %41 = vrot.lane.b32.xlu0 %v21, 5
    %v42 = vpop.permute.xlu0 %41
    %44 = vrot.lane.b32.xlu0 %v21, 7
    %v45 = vpop.permute.xlu0 %44
    %47 = vrot.lane.b32.xlu0 %v21, 9
    %v48 = vpop.permute.xlu0 %47
    %50 = vrot.lane.b32.xlu0 %v21, 11
    %v51 = vpop.permute.xlu0 %50
    %53 = vrot.lane.b32.xlu0 %v21, 13
    %v54 = vpop.permute.xlu0 %53
    %56 = vrot.lane.b32.xlu0 %v21, 15
    %v57 = vpop.permute.xlu0 %56
    %59 = vrot.lane.b32.xlu0 %v21, 17
    %v60 = vpop.permute.xlu0 %59
    %62 = vrot.lane.b32.xlu0 %v21, 19
    %v63 = vpop.permute.xlu0 %62
    %65 = vrot.lane.b32.xlu0 %v21, 21
    %v66 = vpop.permute.xlu0 %65
    %vm68 = vcmask 7168
    %v69 = vsel %vm68, %v24, %v27
    %vm70 = vcmask 15360
    %v71 = vsel %vm70, %v69, %v30
    %vm72 = vcmask 23552
    %v73 = vsel %vm72, %v71, %v33
    %vm74 = vcmask 31744
    %v75 = vsel %vm74, %v73, %v36
    %vm76 = vcmask 39936
    %v77 = vsel %vm76, %v75, %v39
    %vm78 = vcmask 48128
    %v79 = vsel %vm78, %v77, %v42
    %vm80 = vcmask 56320
    %v81 = vsel %vm80, %v79, %v45
    %vm82 = vcmask 187392
    %v83 = vsel %vm82, %v81, %v48
    %vm84 = vcmask 195584
    %v85 = vsel %vm84, %v83, %v51
    %vm86 = vcmask 203776
    %v87 = vsel %vm86, %v85, %v54
    %vm88 = vcmask 211968
    %v89 = vsel %vm88, %v87, %v57
    %vm90 = vcmask 220160
    %v91 = vsel %vm90, %v89, %v60
    %vm92 = vcmask 228352
    %v93 = vsel %vm92, %v91, %v63
    %vm94 = vcmask 236544
    %v95 = vsel %vm94, %v93, %v66
    %v96 = vmul.f32 %v95, 0.3989423
    %v97 = vmul.f32 %v95, 0.24197072
    %99 = vrot.lane.b32.xlu0 %v97, 127
    %v100 = vpop.permute.xlu0 %99
    %v102 = vadd.f32 %v96, %v100
    %103 = vrot.lane.b32.xlu0 %v97, 1
    %v104 = vpop.permute.xlu0 %103
    %v106 = vadd.f32 %v102, %v104
    %v107 = vmul.f32 %v95, 0.053990968
    %109 = vrot.lane.b32.xlu0 %v107, 126
    %v110 = vpop.permute.xlu0 %109
    %v112 = vadd.f32 %v106, %v110
    %113 = vrot.lane.b32.xlu0 %v107, 2
    %v114 = vpop.permute.xlu0 %113
    %v116 = vadd.f32 %v112, %v114
    %v117 = vmul.f32 %v95, 0.0044318484
    %119 = vrot.lane.b32.xlu0 %v117, 125
    %v120 = vpop.permute.xlu0 %119
    %v122 = vadd.f32 %v116, %v120
    %123 = vrot.lane.b32.xlu0 %v117, 3
    %v124 = vpop.permute.xlu0 %123
    %v126 = vadd.f32 %v122, %v124
    %v127 = vmul.f32 %v95, 0.00013383022
    %129 = vrot.lane.b32.xlu0 %v127, 124
    %v130 = vpop.permute.xlu0 %129
    %v132 = vadd.f32 %v126, %v130
    %133 = vrot.lane.b32.xlu0 %v127, 4
    %v134 = vpop.permute.xlu0 %133
    %v136 = vadd.f32 %v132, %v134
    %v137 = vmul.f32 %v95, 1.4867195e-06
    %139 = vrot.lane.b32.xlu0 %v137, 123
    %v140 = vpop.permute.xlu0 %139
    %v142 = vadd.f32 %v136, %v140
    %143 = vrot.lane.b32.xlu0 %v137, 5
    %v144 = vpop.permute.xlu0 %143
    %v146 = vadd.f32 %v142, %v144
    %v147 = vmul.f32 %v95, 6.075883e-09
    %149 = vrot.lane.b32.xlu0 %v147, 122
    %v150 = vpop.permute.xlu0 %149
    %v152 = vadd.f32 %v146, %v150
    %153 = vrot.lane.b32.xlu0 %v147, 6
    %v154 = vpop.permute.xlu0 %153
    %v156 = vadd.f32 %v152, %v154
    %v157 = vmul.f32 %v95, 9.134721e-12
    %159 = vrot.lane.b32.xlu0 %v157, 121
    %v160 = vpop.permute.xlu0 %159
    %v162 = vadd.f32 %v156, %v160
    %163 = vrot.lane.b32.xlu0 %v157, 7
    %v164 = vpop.permute.xlu0 %163
    %v166 = vadd.f32 %v162, %v164
    %168 = vrot.lane.b32.xlu0 %v166, 121
    %v169 = vpop.permute.xlu0 %168
    %vm171 = vcmask 130048
    %172 = vst.msk [vmem:[#allocation5] sm:$0xff] %vm171, %v169
    // Predicated region
    $region10: #{gaussian_smoothing.1} parent=1 // pred_check
      _
    $region11: #{gaussian_smoothing.1} parent=1 // pred_check_branch
      %174 = sbr.rel (0) target = $region13
    $region12: #{gaussian_smoothing.1} parent=1 // pred_region
      %s176 = ssub.s32 128, 128
      %177 = vsyncadd [#allocation4], %s176
      %s179 = sshll.u32 [#allocation5], 4
      %s180 = int_to_ptr.vmem [resolvable:$true] %s179
      %182 = dma.vmem_to_hbm [thread:$0]  %s180, 128, %s1, [#allocation4]
    $region13: #{gaussian_smoothing.1} parent=1 // pred_fallthru
      _
    // Predicated region
    $region14: #{gaussian_smoothing.1} parent=1 // pred_check
      _
    $region15: #{gaussian_smoothing.1} parent=1 // pred_check_branch
      %184 = sbr.rel (0) target = $region17
    $region16: #{gaussian_smoothing.1} parent=1 // pred_region
      %185 = dma.done [#allocation4], 128
    $region17: #{gaussian_smoothing.1} parent=1 // pred_fallthru
      _
    %186 = vsyncpa [#allocation3], 1
    %187 = vsyncpa [#allocation4], 1

</llo_original>
